<compile_context>
chip_gen: v5e
topology: v5e:2x2
jax: 0.10.0
libtpu: 0.0.40
codegen_flags: <defaults>
</compile_context>

<pallas_src>
import math

import jax
import jax.numpy as jnp
from jax.experimental import pallas as pl
from jax.experimental.pallas import tpu as pltpu

_LANE = 128


def _mlp_kernel(p_ref, xt_ref, ot_ref):
    # Packed parameter slab: one vreg worth of data.
    p = p_ref[...]                     # (8, 128) f32
    w1t = p[0:5, 0:13]                 # (5, 13)  = w1.T
    b1 = p[0:5, 13:14]                 # (5, 1)
    w23t = p[5:6, 0:5]                 # (1, 5)   = (w2 @ w3).T
    b23 = p[5:6, 13:14]                # (1, 1)   = b2 @ w3 + b3

    xt = xt_ref[...]                   # (13, TB) f32, batch on the lane axis

    # Layer 1 (transposed): (5,13) @ (13,TB) + (5,1), then sigmoid.
    h1 = jnp.dot(w1t, xt, preferred_element_type=jnp.float32) + b1
    h1 = pl.reciprocal(1.0 + jnp.exp(-h1), approx=False)   # exact sigmoid

    # Folded layers 2+3: (1,5) @ (5,TB) + (1,1).
    out = jnp.dot(w23t, h1, preferred_element_type=jnp.float32) + b23
    ot_ref[...] = out.astype(ot_ref.dtype)                  # (1, TB) lane-dense


def network_forward(x, w1, b1, w2, b2, w3, b3, *, block_b=32768):
    """Pallas forward for the 13 -> 5 -> 3 -> 1 MLP.  x: (B, 13) float32."""
    B = x.shape[0]
    f32 = jnp.float32
    x = x.astype(f32)

    # Fold layers 2 and 3 (no activation between them in the PyTorch module).
    w23 = (w2.astype(f32) @ w3.astype(f32)).reshape(-1)            # (5,)
    b23 = (b2.astype(f32) @ w3.astype(f32) + b3.astype(f32))[0]    # scalar

    # Pack every parameter into a single lane-aligned (8, 128) slab.
    p = jnp.zeros((8, _LANE), f32)
    p = p.at[0:5, 0:13].set(w1.astype(f32).T)   # w1.T
    p = p.at[0:5, 13].set(b1.astype(f32))       # b1 as a column
    p = p.at[5, 0:5].set(w23)                   # (w2 @ w3).T as a row
    p = p.at[5, 13].set(b23)                    # folded bias

    # Batch on lanes: pad batch up to a multiple of the (128-aligned) block.
    b_pad = max(_LANE, -(-B // _LANE) * _LANE)
    tb = min(block_b, b_pad)
    tb = max(_LANE, (tb // _LANE) * _LANE)
    b_pad = -(-b_pad // tb) * tb
    n_blocks = b_pad // tb

    # Layout plumbing only: transpose + zero-pad x so the kernel sees (13, Bp).
    xt = jnp.zeros((13, b_pad), f32).at[:, :B].set(x.T)

    out_t = pl.pallas_call(
        _mlp_kernel,
        out_shape=jax.ShapeDtypeStruct((1, b_pad), f32),
        grid=(n_blocks,),
        in_specs=[
            pl.BlockSpec((8, _LANE), lambda i: (0, 0)),   # packed params (resident)
            pl.BlockSpec((13, tb), lambda i: (0, i)),     # x.T batch tile
        ],
        out_specs=pl.BlockSpec((1, tb), lambda i: (0, i)),
        compiler_params=pltpu.CompilerParams(
            dimension_semantics=("parallel",)),
    )(p, xt)

    return out_t[0, :B].reshape(B, 1)


def _kaiming_uniform(key, shape):
    # Matches torch.nn.init.kaiming_uniform_ defaults: bound = sqrt(6 / fan_in)
    fan_in = shape[0]
    bound = math.sqrt(6.0 / fan_in)
    return jax.random.uniform(key, shape, dtype=jnp.float32,
                              minval=-bound, maxval=bound)


def init_params(key):
    k1, k2, k3 = jax.random.split(key, 3)
    w1 = _kaiming_uniform(k1, (13, 5))
    w2 = _kaiming_uniform(k2, (5, 3))
    w3 = _kaiming_uniform(k3, (3, 1))
    b1 = jnp.full((5,), 0.1, dtype=jnp.float32)
    b2 = jnp.full((3,), 0.1, dtype=jnp.float32)
    b3 = jnp.full((1,), 0.1, dtype=jnp.float32)
    return w1, b1, w2, b2, w3, b3


def reference_forward(x, w1, b1, w2, b2, w3, b3):
    h = x @ w1 + b1
    h = 1.0 / (1.0 + jnp.exp(-h))
    h = h @ w2 + b2
    return h @ w3 + b3


if __name__ == "__main__":
    key = jax.random.PRNGKey(0)
    k_params, k_x = jax.random.split(key)

    w1, b1, w2, b2, w3, b3 = init_params(k_params)

    batch = 8
    x = jax.random.normal(k_x, (batch, 13), dtype=jnp.float32)

    out = network_forward(x, w1, b1, w2, b2, w3, b3)
    out = jax.block_until_ready(out)

    ref = reference_forward(x, w1, b1, w2, b2, w3, b3)
    assert out.shape == (batch, 1), out.shape
    assert jnp.allclose(out, ref, atol=1e-5, rtol=1e-4), (out, ref)

    print("KERNEL_OK")
</pallas_src>

<mosaic_0001>
module attributes {stable_mosaic.version = 11 : i64} {
  func.func @_mlp_kernel(%arg0: i32, %arg1: memref<8x128xf32, #tpu.memory_space<vmem>>, %arg2: memref<13x128xf32, #tpu.memory_space<vmem>>, %arg3: memref<1x128xf32, #tpu.memory_space<vmem>>) attributes {dimension_semantics = [#tpu.dimension_semantics<parallel>], iteration_bounds = array<i64: 1>, scalar_prefetch = 0 : i64, scratch_operands = 0 : i64, tpu.core_type = #tpu.core_type<tc>, window_params = [{pipeline_mode = #tpu.pipeline_mode<synchronous>, transform_indices = @transform_0, window_bounds = array<i64: 8, 128>}, {transform_indices = @transform_1, window_bounds = array<i64: 13, 128>}, {transform_indices = @transform_2, window_bounds = array<i64: 1, 128>}]} {
    %c0 = arith.constant 0 : index
    %c0_0 = arith.constant 0 : index
    %0 = vector.load %arg1[%c0, %c0_0] : memref<8x128xf32, #tpu.memory_space<vmem>>, vector<8x128xf32>
    %1 = vector.extract_strided_slice %0 {offsets = [0, 0], sizes = [5, 13], strides = [1, 1]} : vector<8x128xf32> to vector<5x13xf32>
    %2 = vector.extract_strided_slice %0 {offsets = [0, 13], sizes = [5, 1], strides = [1, 1]} : vector<8x128xf32> to vector<5x1xf32>
    %3 = vector.extract_strided_slice %0 {offsets = [5, 0], sizes = [1, 5], strides = [1, 1]} : vector<8x128xf32> to vector<1x5xf32>
    %4 = vector.extract_strided_slice %0 {offsets = [5, 13], sizes = [1, 1], strides = [1, 1]} : vector<8x128xf32> to vector<1x1xf32>
    %c0_1 = arith.constant 0 : index
    %c0_2 = arith.constant 0 : index
    %5 = vector.load %arg2[%c0_1, %c0_2] : memref<13x128xf32, #tpu.memory_space<vmem>>, vector<13x128xf32>
    %cst = arith.constant dense<0.000000e+00> : vector<5x128xf32>
    %6 = tpu.matmul %1, %5, %cst {dimension_numbers = #tpu.dot_dimension_numbers<[1], [0], [0], [1], [0, 0, 1, 1], [], []>} : vector<5x13xf32>, vector<13x128xf32>, vector<5x128xf32> -> vector<5x128xf32>
    %7 = vector.broadcast %2 : vector<5x1xf32> to vector<5x128xf32>
    %8 = arith.addf %6, %7 : vector<5x128xf32>
    %cst_3 = arith.constant 0.000000e+00 : f32
    %9 = vector.broadcast %cst_3 : f32 to vector<5x128xf32>
    %10 = arith.subf %9, %8 : vector<5x128xf32>
    %11 = math.exp %10 : vector<5x128xf32>
    %cst_4 = arith.constant 1.000000e+00 : f32
    %12 = vector.broadcast %cst_4 : f32 to vector<5x128xf32>
    %13 = arith.addf %12, %11 : vector<5x128xf32>
    %14 = tpu.reciprocal %13 : vector<5x128xf32> -> vector<5x128xf32>
    %cst_5 = arith.constant dense<0.000000e+00> : vector<1x128xf32>
    %15 = tpu.matmul %3, %14, %cst_5 {dimension_numbers = #tpu.dot_dimension_numbers<[1], [0], [0], [1], [0, 0, 1, 1], [], []>} : vector<1x5xf32>, vector<5x128xf32>, vector<1x128xf32> -> vector<1x128xf32>
    %16 = vector.broadcast %4 : vector<1x1xf32> to vector<1x128xf32>
    %17 = arith.addf %15, %16 : vector<1x128xf32>
    %c0_6 = arith.constant 0 : index
    %c0_7 = arith.constant 0 : index
    %18 = vector.load %arg3[%c0_6, %c0_7] : memref<1x128xf32, #tpu.memory_space<vmem>>, vector<1x128xf32>
    tpu.vector_store %arg3[%c0_6, %c0_7], %17 {strides = array<i32>} : memref<1x128xf32, #tpu.memory_space<vmem>>, vector<1x128xf32>,
    return
  }
  func.func @transform_0(%arg0: i32) -> (i32, i32) {
    %c0_i32 = arith.constant 0 : i32
    %c0_i32_0 = arith.constant 0 : i32
    %c0_i32_1 = arith.constant 0 : i32
    return %c0_i32, %c0_i32_0 : i32, i32
  }
  func.func @transform_1(%arg0: i32) -> (i32, i32) {
    %c0_i32 = arith.constant 0 : i32
    %c0_i32_0 = arith.constant 0 : i32
    return %c0_i32, %arg0 : i32, i32
  }
  func.func @transform_2(%arg0: i32) -> (i32, i32) {
    %c0_i32 = arith.constant 0 : i32
    %c0_i32_0 = arith.constant 0 : i32
    return %c0_i32, %arg0 : i32, i32
  }
}

</mosaic_0001>

<llo_original>
// kernel: tpu_custom_call.1
$region0: #{tpu_custom_call.1}
  #allocation0 [shape = 'u32[]', space=smem, size = 0x4, offset = 0x4, fixed_abs, tag = 'smem constant byte address 0x4 - core index']
  #allocation1 [shape = 'u32[72,128]{1,0:T(1,128)}', space=vmem, size = 0x9000, scoped, tag = 'internal scratch']
  %s0 = inlined_call_operand.hbm [shape: f32[8,128], index: 0, kind: input, shape index: {}]
  %s1 = inlined_call_operand.hbm [shape: f32[13,128], index: 1, kind: input, shape index: {}]
  %s2 = inlined_call_operand.hbm [shape: f32[1,128], index: 2, kind: output, shape index: {}]
  %s3 = sld [smem:[#allocation0]]
  $region26: #{tpu_custom_call.1} parent=0
    _
  %s5 = ssub.s32 1, %s3
  %s6 = scalar_select 0, %s5, %s3
  $region1: #{tpu_custom_call.1} parent=0
    #allocation2 [shape = 'u8[4096]{0}', space=vmem, size = 0x1000, scoped, tag = 'input window, operand 0, single buffered']
    #allocation3 [shape = 's32[1]{0}', space=sflag, size = 0x4, scoped, tag = 'scoped memory for tpu_custom_call.1']
    #allocation4 [shape = 's32[1]{0}', space=sflag, size = 0x4, scoped, tag = 'scoped memory for tpu_custom_call.1']
    #allocation5 [shape = 'u8[8192]{0}', space=vmem, size = 0x2000, scoped, tag = 'input window, operand 1, single buffered']
    #allocation6 [shape = 's32[1]{0}', space=sflag, size = 0x4, scoped, tag = 'scoped memory for tpu_custom_call.1']
    #allocation7 [shape = 'u8[512]{0}', space=vmem, size = 0x400, scoped, tag = 'output window, operand 0, single buffered']
    %7 = vsyncpa [#allocation3], 0
    %8 = vsyncpa [#allocation6], 0
    %9 = vsyncpa [#allocation4], 0
    // Predicated region
    $region2: #{tpu_custom_call.1} parent=1 // pred_check
      _
    $region3: #{tpu_custom_call.1} parent=1 // pred_check_branch
      %11 = sbr.rel (0) target = $region5
    $region4: #{tpu_custom_call.1} parent=1 // pred_region
      %13 = vsyncadd [#allocation3], 0
      %s15 = sshll.u32 %s0, 4
      %s16 = int_to_ptr.hbm [resolvable:$true] %s15
      %s17 = sshll.u32 [#allocation2], 4
      %s18 = int_to_ptr.vmem [resolvable:$true] %s17
      %20 = dma.hbm_to_vmem [thread:$0]  %s16, 128, %s18, [#allocation3]
    $region5: #{tpu_custom_call.1} parent=1 // pred_fallthru
      _
    // Predicated region
    $region6: #{tpu_custom_call.1} parent=1 // pred_check
      _
    $region7: #{tpu_custom_call.1} parent=1 // pred_check_branch
      %22 = sbr.rel (0) target = $region9
    $region8: #{tpu_custom_call.1} parent=1 // pred_region
      %24 = vsyncadd [#allocation6], 0
      %s25 = sshll.u32 %s1, 4
      %s26 = int_to_ptr.hbm [resolvable:$true] %s25
      %s27 = sshll.u32 [#allocation5], 4
      %s28 = int_to_ptr.vmem [resolvable:$true] %s27
      %33 = dma.hbm_to_vmem [thread:$0]  %s26, 256, %s28, [#allocation6], 128, 128, 8
    $region9: #{tpu_custom_call.1} parent=1 // pred_fallthru
      _
    // Predicated region
    $region10: #{tpu_custom_call.1} parent=1 // pred_check
      _
    $region11: #{tpu_custom_call.1} parent=1 // pred_check_branch
      %35 = sbr.rel (0) target = $region13
    $region12: #{tpu_custom_call.1} parent=1 // pred_region
      %37 = dma.done [#allocation3], 128
    $region13: #{tpu_custom_call.1} parent=1 // pred_fallthru
      _
    // Predicated region
    $region14: #{tpu_custom_call.1} parent=1 // pred_check
      _
    $region15: #{tpu_custom_call.1} parent=1 // pred_check_branch
      %39 = sbr.rel (0) target = $region17
    $region16: #{tpu_custom_call.1} parent=1 // pred_region
      %41 = dma.done [#allocation6], 256
    $region17: #{tpu_custom_call.1} parent=1 // pred_fallthru
      _
    %v42 = vld [vmem:[#allocation2] sm:$0xff]
    %v43 = vld [vmem:[#allocation5] sm:$0xff]
    %v44 = vld [vmem:[#allocation5 + $0x8] sm:$0x1f]
    %46 = vset.pattern.permute.xlu0 13
    %47 = vperm.xlu0 %46, %v42
    %v48 = vpop.permute.xlu0 %47
    %vm50 = vcmask 105472
    %v51 = vsel %vm50, %v42, 0
    %vm53 = vcmask 1044480
    %v55 = vsel %vm53, %v44, 0
    %57 = vmatpush.msra.mxu0 0.0
    %58 = vmatpush.msra.mxu0 0.0
    %59 = vmatpush.msra.mxu0 0.0
    %60 = vmatpush.msra.mxu0 0.0
    %61 = vmatpush.msra.mxu0 0.0
    %62 = vmatpush.msra.mxu0 0.0
    %63 = vmatpush.msra.mxu0 0.0
    %64 = vmatpush.msra.mxu0 0.0
    %65 = vmatpush.msra.mxu0 0.0
    %66 = vmatpush.msra.mxu0 0.0
    %67 = vmatpush.msra.mxu0 0.0
    %68 = vmatpush.msra.mxu0 0.0
    %69 = vmatpush.msra.mxu0 0.0
    %70 = vmatpush.msra.mxu0 0.0
    %71 = vmatpush.msra.mxu0 %v55
    %72 = vmatpush.msra.mxu0 %v43
    %73 = vmatmul.f32.gmra.mxu0 %v51
    %v74 = vpop.f32.mrf.mxu0
    %v75 = vadd.f32 %v48, %v74
    %76 = vdwg.mxu0
    %v77 = vsub.f32 0.0, %v75
    %v78 = vmul.f32 %v77, 1.442695
    %v79 = vpow.pop %v78
    %v80 = vadd.f32 %v79, 1.0
    %v81 = vrcp.pop %v80
    %v82 = vmul.f32 %v80, %v81
    %v83 = vsub.f32 1.0, %v82
    %v84 = vmul.f32 %v81, %v83
    %v85 = vadd.f32 %v81, %v84
    %vm86 = vweird.f32 %v80
    %vm87 = vweird.f32 %v81
    %vm88 = vmor %vm86, %vm87
    %v89 = vsel %vm88, %v81, %v85
    %v90 = vand.u32 2147483647, %v80
    %vm91 = vcmp.eq.f32.partialorder %v90, 8.507059e+37
    %v92 = vand.u32 %v80, 2147483648
    %v93 = vor.u32 1.1754944e-38, %v92
    %v94 = vsel %vm91, %v93, %v89
    %v95 = vrot.slane %v42, 5
    %v96 = vrot.slane %v48, 5
    %vm98 = vcmask 39936
    %v99 = vsel %vm98, %v95, 0
    %v102 = vsel %vm53, %v94, 0
    %104 = vmatpush.msra.mxu0 0.0
    %105 = vmatpush.msra.mxu0 0.0
    %106 = vmatpush.msra.mxu0 0.0
    %107 = vmatpush.msra.mxu0 0.0
    %108 = vmatpush.msra.mxu0 0.0
    %109 = vmatpush.msra.mxu0 0.0
    %110 = vmatpush.msra.mxu0 0.0
    %111 = vmatpush.msra.mxu0 0.0
    %112 = vmatpush.msra.mxu0 0.0
    %113 = vmatpush.msra.mxu0 0.0
    %114 = vmatpush.msra.mxu0 0.0
    %115 = vmatpush.msra.mxu0 0.0
    %116 = vmatpush.msra.mxu0 0.0
    %117 = vmatpush.msra.mxu0 0.0
    %118 = vmatpush.msra.mxu0 0.0
    %119 = vmatpush.msra.mxu0 %v102
    %120 = vmatmul.f32.gmra.mxu0 %v99
    %v121 = vpop.f32.mrf.mxu0
    %v122 = vadd.f32 %v96, %v121
    %123 = vdwg.mxu0
    %124 = vst [vmem:[#allocation7] sm:$0x1] %v122
    // Predicated region
    $region18: #{tpu_custom_call.1} parent=1 // pred_check
      _
    $region19: #{tpu_custom_call.1} parent=1 // pred_check_branch
      %126 = sbr.rel (0) target = $region21
    $region20: #{tpu_custom_call.1} parent=1 // pred_region
      %128 = vsyncadd [#allocation4], 0
      %s130 = sshll.u32 [#allocation7], 4
      %s131 = int_to_ptr.vmem [resolvable:$true] %s130
      %s132 = sshll.u32 %s2, 4
      %s133 = int_to_ptr.hbm [resolvable:$true] %s132
      %135 = dma.vmem_to_hbm [thread:$0]  %s131, 16, %s133, [#allocation4]
    $region21: #{tpu_custom_call.1} parent=1 // pred_fallthru
      _
    // Predicated region
    $region22: #{tpu_custom_call.1} parent=1 // pred_check
      _
    $region23: #{tpu_custom_call.1} parent=1 // pred_check_branch
      %137 = sbr.rel (0) target = $region25
    $region24: #{tpu_custom_call.1} parent=1 // pred_region
      %139 = dma.done [#allocation4], 16
    $region25: #{tpu_custom_call.1} parent=1 // pred_fallthru
      _
    %140 = vsyncpa [#allocation3], 1
    %141 = vsyncpa [#allocation6], 1
    %142 = vsyncpa [#allocation4], 1

</llo_original>
